<compile_context>
chip_gen: v6e
topology: v6e:2x2x1
jax: 0.10.0
libtpu: 0.0.40
codegen_flags: <defaults>
</compile_context>

<pallas_src>
import jax
import jax.numpy as jnp
from jax.experimental import pallas as pl
from jax.experimental.pallas import tpu as pltpu

# Widest lane counts to try (last dim of the 2D slab -> 128-lane vreg axis).
_LANE_CANDIDATES = (8192, 4096, 2048, 1024, 512, 256, 128)
# ~4 MiB per block: at/above the measured HBM-roofline knee for streaming ops.
_TARGET_BLOCK_BYTES = 4 * 1024 * 1024
# in + out, double-buffered, 4 MiB each = 16 MiB; give 32 MiB of headroom.
_VMEM_LIMIT_BYTES = 32 * 1024 * 1024


def _relu_kernel(x_ref, o_ref):
    # Elementwise ReLU on the current VMEM tile (pure VPU work).
    zero = jnp.zeros((), dtype=x_ref.dtype)
    o_ref[...] = jnp.maximum(x_ref[...], zero)


def _relu_2d(x2d: jax.Array) -> jax.Array:
    """Tiled elementwise ReLU over a lane-dense 2D slab (rows, lanes)."""
    rows, lanes = x2d.shape
    bytes_per_row = lanes * x2d.dtype.itemsize

    # Row-tile sized for ~_TARGET_BLOCK_BYTES, rounded down to 8 sublanes.
    tr = max(_TARGET_BLOCK_BYTES // bytes_per_row, 8)
    tr = max((tr // 8) * 8, 8)
    if tr >= rows:
        # One block covering all rows (full-extent dim -> no (8,) constraint).
        tr = rows

    grid = (pl.cdiv(rows, tr),)  # ragged last block handled by Pallas masking

    return pl.pallas_call(
        _relu_kernel,
        out_shape=jax.ShapeDtypeStruct((rows, lanes), x2d.dtype),
        grid=grid,
        in_specs=[pl.BlockSpec((tr, lanes), lambda i: (i, 0))],
        out_specs=pl.BlockSpec((tr, lanes), lambda i: (i, 0)),
        compiler_params=pltpu.CompilerParams(
            dimension_semantics=("parallel",),
            vmem_limit_bytes=_VMEM_LIMIT_BYTES,
        ),
    )(x2d)


@jax.jit
def custom_relu(x: jax.Array) -> jax.Array:
    """Elementwise ReLU matching torch relu_cuda_forward semantics."""
    orig_shape = x.shape
    n = x.size
    if n == 0:
        return x

    # Prefer the widest lane count that divides n exactly -> zero-copy reshape,
    # no pad, no slice-back (saves a full extra HBM round trip of the tensor).
    lanes = None
    for cand in _LANE_CANDIDATES:
        if n % cand == 0:
            lanes = cand
            break

    if lanes is not None:
        x2d = x.reshape(n // lanes, lanes)
        return _relu_2d(x2d).reshape(orig_shape)

    # Fallback: element count not a multiple of 128. Pad the flat tail
    # (< 128 elements) up to a 128-lane slab, then slice back.
    lanes = 128
    n_pad = pl.cdiv(n, lanes) * lanes
    flat = jnp.pad(x.reshape(-1), (0, n_pad - n))
    out2d = _relu_2d(flat.reshape(n_pad // lanes, lanes))
    return out2d.reshape(-1)[:n].reshape(orig_shape)


if __name__ == "__main__":
    key = jax.random.PRNGKey(0)

    # Primary NCHW input consistent with a conv-style activation tensor.
    x = jax.random.normal(key, (2, 4, 16, 16), dtype=jnp.float32)
    y = jax.block_until_ready(custom_relu(x))
    y_ref = jnp.maximum(x, 0.0)
    assert y.shape == x.shape and y.dtype == x.dtype
    assert bool(jnp.allclose(y, y_ref)), "mismatch vs reference ReLU"

    # Odd element count -> exercises the small-pad fallback path.
    x_odd = jax.random.normal(jax.random.PRNGKey(1), (3, 5, 7, 9), dtype=jnp.float32)
    y_odd = jax.block_until_ready(custom_relu(x_odd))
    assert bool(jnp.allclose(y_odd, jnp.maximum(x_odd, 0.0))), "mismatch (odd shape)"

    # bf16 input -> exercises dtype-generic path (packed sublanes).
    x_bf16 = jax.random.normal(jax.random.PRNGKey(2), (2, 8, 16, 16), dtype=jnp.bfloat16)
    y_bf16 = jax.block_until_ready(custom_relu(x_bf16))
    assert y_bf16.dtype == jnp.bfloat16
    assert bool(jnp.allclose(y_bf16.astype(jnp.float32),
                             jnp.maximum(x_bf16.astype(jnp.float32), 0.0))), "mismatch (bf16)"

    print("KERNEL_OK")
</pallas_src>

<mosaic_0001>
module attributes {stable_mosaic.version = 11 : i64} {
  func.func @_relu_kernel(%arg0: i32, %arg1: memref<1x2048xf32, #tpu.memory_space<vmem>>, %arg2: memref<1x2048xf32, #tpu.memory_space<vmem>>) attributes {dimension_semantics = [#tpu.dimension_semantics<parallel>], iteration_bounds = array<i64: 1>, scalar_prefetch = 0 : i64, scratch_operands = 0 : i64, tpu.core_type = #tpu.core_type<tc>, window_params = [{transform_indices = @transform_0, window_bounds = array<i64: 1, 2048>}, {transform_indices = @transform_1, window_bounds = array<i64: 1, 2048>}]} {
    %c0 = arith.constant 0 : index
    %c0_0 = arith.constant 0 : index
    %0 = vector.load %arg1[%c0, %c0_0] : memref<1x2048xf32, #tpu.memory_space<vmem>>, vector<1x2048xf32>
    %cst = arith.constant 0.000000e+00 : f32
    %1 = vector.broadcast %cst : f32 to vector<1x2048xf32>
    %2 = arith.maximumf %0, %1 : vector<1x2048xf32>
    %c0_1 = arith.constant 0 : index
    %c0_2 = arith.constant 0 : index
    %3 = vector.load %arg2[%c0_1, %c0_2] : memref<1x2048xf32, #tpu.memory_space<vmem>>, vector<1x2048xf32>
    tpu.vector_store %arg2[%c0_1, %c0_2], %2 {strides = array<i32>} : memref<1x2048xf32, #tpu.memory_space<vmem>>, vector<1x2048xf32>,
    return
  }
  func.func @transform_0(%arg0: i32) -> (i32, i32) {
    %c0_i32 = arith.constant 0 : i32
    %c0_i32_0 = arith.constant 0 : i32
    return %arg0, %c0_i32 : i32, i32
  }
  func.func @transform_1(%arg0: i32) -> (i32, i32) {
    %c0_i32 = arith.constant 0 : i32
    %c0_i32_0 = arith.constant 0 : i32
    return %arg0, %c0_i32 : i32, i32
  }
}

</mosaic_0001>

<llo_original>
// kernel: custom_relu.1
$region0: #{custom_relu.1}
  #allocation0 [shape = 'u32[]', space=smem, size = 0x4, offset = 0x4, fixed_abs, tag = 'smem constant byte address 0x4 - core index']
  #allocation1 [shape = 'u32[144,128]{1,0:T(1,128)}', space=vmem, size = 0x12000, scoped, tag = 'internal scratch']
  %s0 = inlined_call_operand.vmem [shape: f32[1,2048], index: 0, kind: input, shape index: {}]
  %s1 = inlined_call_operand.vmem [shape: f32[1,2048], index: 1, kind: output, shape index: {}]
  %s2 = sld [smem:[#allocation0]]
  $region14: #{custom_relu.1} parent=0
    _
  %s4 = ssub.s32 1, %s2
  %s5 = scalar_select 0, %s4, %s2
  // Predicated region
  $region2: #{custom_relu.1} parent=0 // pred_check
    _
  $region3: #{custom_relu.1} parent=0 // pred_check_branch
    %7 = sbr.rel (0) target = $region5
  $region4: #{custom_relu.1} parent=0 // pred_region
    _
  $region5: #{custom_relu.1} parent=0 // pred_fallthru
    _
  %v8 = vld [vmem:[%s0] sm:$0xff]
  %v9 = vld [vmem:[%s0 + $0x8] sm:$0xff]
  %v10 = vmax.f32 %v8, 0.0
  %v11 = vmax.f32 %v9, 0.0
  %12 = vst [vmem:[%s1] sm:$0xff] %v10
  %13 = vst [vmem:[%s1 + $0x8] sm:$0xff] %v11
  // Predicated region
  $region6: #{custom_relu.1} parent=0 // pred_check
    _
  $region7: #{custom_relu.1} parent=0 // pred_check_branch
    %15 = sbr.rel (0) target = $region9
  $region8: #{custom_relu.1} parent=0 // pred_region
    _
  $region9: #{custom_relu.1} parent=0 // pred_fallthru
    _
  // Predicated region
  $region10: #{custom_relu.1} parent=0 // pred_check
    _
  $region11: #{custom_relu.1} parent=0 // pred_check_branch
    %17 = sbr.rel (0) target = $region13
  $region12: #{custom_relu.1} parent=0 // pred_region
    _
  $region13: #{custom_relu.1} parent=0 // pred_fallthru
    _

</llo_original>
